<compile_context>
chip_gen: v6e
topology: v6e:2x2x1
jax: 0.10.0
libtpu: 0.0.40
codegen_flags: <defaults>
</compile_context>

<pallas_src>
import functools

import jax
import jax.numpy as jnp
from jax.experimental import pallas as pl
from jax.experimental.pallas import tpu as pltpu

LOG_STD_MIN = -5.0
LOG_STD_MAX = 2.0

OUT_W = 128  # packed, lane-dense output slab: sample | tanh(mean) | log_std | log_prob


def _actor_kernel(states_ref, z_ref,
                  w0_ref, b0_ref, w1_ref, b1_ref, wl_ref, bl_ref,
                  out_ref, *, action_dim):
    A = action_dim

    # --- MLP hot path: Linear -> ReLU -> Linear -> ReLU (bf16 MXU, f32 accumulate) ---
    x = states_ref[...].astype(jnp.bfloat16)
    h = jnp.dot(x, w0_ref[...], preferred_element_type=jnp.float32) + b0_ref[...]
    h = jnp.maximum(h, 0.0).astype(jnp.bfloat16)
    h = jnp.dot(h, w1_ref[...], preferred_element_type=jnp.float32) + b1_ref[...]
    h = jnp.maximum(h, 0.0).astype(jnp.bfloat16)

    # --- last layer: single matmul producing both heads [tb, 2A], split by lane slices ---
    o = jnp.dot(h, wl_ref[...], preferred_element_type=jnp.float32) + bl_ref[...]
    means = o[:, :A]          # [tb, A]
    pre_ls = o[:, A:]         # [tb, A]

    log_stds = LOG_STD_MIN + 0.5 * (LOG_STD_MAX - LOG_STD_MIN) * (jnp.tanh(pre_ls) + 1.0)
    stds = jnp.exp(log_stds)

    # --- rsample: z ~ N(0,1) -> Affine -> Tanh (all at A-lane width, z unpadded) ---
    z = z_ref[...]                                   # [tb, A]
    pre_tanh = means + stds * z
    samples = jnp.tanh(pre_tanh)

    # --- log_prob of TransformedDistribution (event_dim=1 -> sum over action dim) ---
    half_log_2pi = 0.5 * jnp.log(2.0 * jnp.pi)
    base_lp = -0.5 * z * z - half_log_2pi            # Normal(0,1).log_prob(z)
    # log|d tanh(x)/dx| = 2*(log 2 - x - softplus(-2x))  (torch TanhTransform's stable form)
    log_det_tanh = 2.0 * (jnp.log(2.0) - pre_tanh - jax.nn.softplus(-2.0 * pre_tanh))
    log_prob = jnp.sum(base_lp - log_stds - log_det_tanh, axis=-1, keepdims=True)  # [tb, 1]

    # --- packed, lane-dense output: one [tb, 128] VMEM block, one DMA to HBM per step ---
    out_ref[:, 0:A] = samples
    out_ref[:, A:2 * A] = jnp.tanh(means)
    out_ref[:, 2 * A:3 * A] = log_stds
    out_ref[:, 3 * A:3 * A + 1] = log_prob
    # Lanes [3A+1 : 128] are never read by the wrapper.


def new_actor_forward(states, z, params, *, tile_b=512):
    """states: [B, S] f32; z: [B, A] f32 standard-normal noise for rsample."""
    w0, b0, w1, b1, wl, bl = params
    B, S = states.shape
    A = z.shape[-1]
    assert wl.shape[-1] == 2 * A, "last-layer width must be 2 * action_dim"
    assert 3 * A + 1 <= OUT_W, "packed output layout requires action_dim <= 42"
    # TODO(synk): generalize the packed output slab for action_dim > 42 (multi-vreg slab).

    # Batch tiling: tile is a multiple of 8; ensure >=2 grid steps when possible so the
    # ("parallel",) batch axis can shard across v7x's two TensorCores.
    B8 = pl.cdiv(B, 8) * 8
    tb = max(8, min((tile_b // 8) * 8, B8))
    if B8 >= 16 and tb >= B8:
        tb = pl.cdiv(pl.cdiv(B8, 2), 8) * 8
    Bp = pl.cdiv(B, tb) * tb

    # Fast path: no padding copies when the batch already divides into the tile.
    if Bp == B:
        states_p, z_p = states, z
    else:
        states_p = jnp.zeros((Bp, S), states.dtype).at[:B].set(states)
        z_p = jnp.zeros((Bp, A), z.dtype).at[:B].set(z)

    kernel = functools.partial(_actor_kernel, action_dim=A)

    slab = pl.pallas_call(
        kernel,
        out_shape=jax.ShapeDtypeStruct((Bp, OUT_W), jnp.float32),
        grid=(Bp // tb,),
        in_specs=[
            pl.BlockSpec((tb, S), lambda i: (i, 0)),        # states tile
            pl.BlockSpec((tb, A), lambda i: (i, 0)),        # unpadded noise tile
            pl.BlockSpec(w0.shape, lambda i: (0, 0)),       # weights: batch-independent
            pl.BlockSpec(b0.shape, lambda i: (0, 0)),       #   -> stay VMEM-resident
            pl.BlockSpec(w1.shape, lambda i: (0, 0)),
            pl.BlockSpec(b1.shape, lambda i: (0, 0)),
            pl.BlockSpec(wl.shape, lambda i: (0, 0)),
            pl.BlockSpec(bl.shape, lambda i: (0, 0)),
        ],
        out_specs=pl.BlockSpec((tb, OUT_W), lambda i: (i, 0)),
        compiler_params=pltpu.CompilerParams(
            dimension_semantics=("parallel",),     # shard batch grid across TCs (v7x)
            vmem_limit_bytes=32 * 1024 * 1024,     # explicit: v5e default scoped VMEM is 16 MiB
        ),
    )(states_p, z_p, w0, b0, w1, b1, wl, bl)

    return {
        "sample": slab[:B, 0:A],
        "mean": slab[:B, A:2 * A],
        "log_std": slab[:B, 2 * A:3 * A],
        "log_prob": slab[:B, 3 * A],
        # TODO(synk): torch returns the Distribution object itself ('dist'); no Pallas equivalent.
    }


def _orthogonal(key, in_dim, out_dim):
    # Matches torch.nn.init.orthogonal_ semantics (weights stored as [in, out] for x @ W).
    return jax.nn.initializers.orthogonal()(key, (in_dim, out_dim), jnp.float32)


def make_params(key, state_dim, action_dim, hidden_dims):
    # All weight preprocessing (bf16 cast) happens here, once, out of the forward hot path.
    k0, k1, k2 = jax.random.split(key, 3)
    h0, h1 = hidden_dims
    w0 = _orthogonal(k0, state_dim, h0).astype(jnp.bfloat16)
    b0 = jnp.zeros((1, h0), jnp.float32)
    w1 = _orthogonal(k1, h0, h1).astype(jnp.bfloat16)
    b1 = jnp.zeros((1, h1), jnp.float32)
    wl = _orthogonal(k2, h1, 2 * action_dim).astype(jnp.bfloat16)
    bl = jnp.zeros((1, 2 * action_dim), jnp.float32)
    return (w0, b0, w1, b1, wl, bl)


if __name__ == "__main__":
    key = jax.random.PRNGKey(0)
    k_param, k_state, k_noise = jax.random.split(key, 3)

    batch = 8
    state_dim = 32
    action_dim = 8
    hidden_dims = [32, 32]

    params = make_params(k_param, state_dim, action_dim, hidden_dims)
    states = jax.random.normal(k_state, (batch, state_dim), jnp.float32)
    z = jax.random.normal(k_noise, (batch, action_dim), jnp.float32)  # rsample base noise

    out = new_actor_forward(states, z, params)
    jax.block_until_ready(out)

    assert out["sample"].shape == (batch, action_dim)
    assert out["mean"].shape == (batch, action_dim)
    assert out["log_std"].shape == (batch, action_dim)
    assert out["log_prob"].shape == (batch,)

    # Pure-JAX reference of the same math (same bf16-weight / f32-accumulate pipeline).
    w0, b0, w1, b1, wl, bl = params
    xb = states.astype(jnp.bfloat16)
    h = jnp.maximum(jnp.dot(xb, w0, preferred_element_type=jnp.float32) + b0, 0.0)
    h = jnp.maximum(jnp.dot(h.astype(jnp.bfloat16), w1,
                            preferred_element_type=jnp.float32) + b1, 0.0)
    o = jnp.dot(h.astype(jnp.bfloat16), wl, preferred_element_type=jnp.float32) + bl
    means_ref, pre_ls_ref = o[:, :action_dim], o[:, action_dim:]
    ls_ref = LOG_STD_MIN + 0.5 * (LOG_STD_MAX - LOG_STD_MIN) * (jnp.tanh(pre_ls_ref) + 1.0)
    pre = means_ref + jnp.exp(ls_ref) * z
    samp_ref = jnp.tanh(pre)
    lp_ref = jnp.sum(-0.5 * z * z - 0.5 * jnp.log(2 * jnp.pi) - ls_ref
                     - 2.0 * (jnp.log(2.0) - pre - jax.nn.softplus(-2.0 * pre)), axis=-1)

    assert jnp.allclose(out["sample"], samp_ref, atol=5e-3), "sample mismatch"
    assert jnp.allclose(out["mean"], jnp.tanh(means_ref), atol=5e-3), "mean mismatch"
    assert jnp.allclose(out["log_std"], ls_ref, atol=5e-3), "log_std mismatch"
    assert jnp.allclose(out["log_prob"], lp_ref, atol=5e-2), "log_prob mismatch"

    print("KERNEL_OK")
</pallas_src>

<mosaic_0001>
module attributes {stable_mosaic.version = 11 : i64} {
  func.func @_actor_kernel(%arg0: i32, %arg1: memref<8x32xf32, #tpu.memory_space<vmem>>, %arg2: memref<8x8xf32, #tpu.memory_space<vmem>>, %arg3: memref<32x32xbf16, #tpu.memory_space<vmem>>, %arg4: memref<1x32xf32, #tpu.memory_space<vmem>>, %arg5: memref<32x32xbf16, #tpu.memory_space<vmem>>, %arg6: memref<1x32xf32, #tpu.memory_space<vmem>>, %arg7: memref<32x16xbf16, #tpu.memory_space<vmem>>, %arg8: memref<1x16xf32, #tpu.memory_space<vmem>>, %arg9: memref<8x128xf32, #tpu.memory_space<vmem>>) attributes {dimension_semantics = [#tpu.dimension_semantics<parallel>], iteration_bounds = array<i64: 1>, scalar_prefetch = 0 : i64, scratch_operands = 0 : i64, tpu.core_type = #tpu.core_type<tc>, window_params = [{transform_indices = @transform_0, window_bounds = array<i64: 8, 32>}, {transform_indices = @transform_1, window_bounds = array<i64: 8, 8>}, {pipeline_mode = #tpu.pipeline_mode<synchronous>, transform_indices = @transform_2, window_bounds = array<i64: 32, 32>}, {pipeline_mode = #tpu.pipeline_mode<synchronous>, transform_indices = @transform_3, window_bounds = array<i64: 1, 32>}, {pipeline_mode = #tpu.pipeline_mode<synchronous>, transform_indices = @transform_4, window_bounds = array<i64: 32, 32>}, {pipeline_mode = #tpu.pipeline_mode<synchronous>, transform_indices = @transform_5, window_bounds = array<i64: 1, 32>}, {pipeline_mode = #tpu.pipeline_mode<synchronous>, transform_indices = @transform_6, window_bounds = array<i64: 32, 16>}, {pipeline_mode = #tpu.pipeline_mode<synchronous>, transform_indices = @transform_7, window_bounds = array<i64: 1, 16>}, {transform_indices = @transform_8, window_bounds = array<i64: 8, 128>}]} {
    %c0 = arith.constant 0 : index
    %c0_0 = arith.constant 0 : index
    %0 = vector.load %arg1[%c0, %c0_0] : memref<8x32xf32, #tpu.memory_space<vmem>>, vector<8x32xf32>
    %1 = arith.truncf %0 : vector<8x32xf32> to vector<8x32xbf16>
    %c0_1 = arith.constant 0 : index
    %c0_2 = arith.constant 0 : index
    %2 = vector.load %arg3[%c0_1, %c0_2] : memref<32x32xbf16, #tpu.memory_space<vmem>>, vector<32x32xbf16>
    %cst = arith.constant dense<0.000000e+00> : vector<8x32xf32>
    %3 = tpu.matmul %1, %2, %cst {dimension_numbers = #tpu.dot_dimension_numbers<[1], [0], [0], [1], [0, 0, 1, 1], [], []>} : vector<8x32xbf16>, vector<32x32xbf16>, vector<8x32xf32> -> vector<8x32xf32>
    %c0_3 = arith.constant 0 : index
    %c0_4 = arith.constant 0 : index
    %4 = vector.load %arg4[%c0_3, %c0_4] : memref<1x32xf32, #tpu.memory_space<vmem>>, vector<1x32xf32>
    %5 = vector.broadcast %4 : vector<1x32xf32> to vector<8x32xf32>
    %6 = arith.addf %3, %5 : vector<8x32xf32>
    %cst_5 = arith.constant 0.000000e+00 : f32
    %7 = vector.broadcast %cst_5 : f32 to vector<8x32xf32>
    %8 = arith.maximumf %6, %7 : vector<8x32xf32>
    %9 = arith.truncf %8 : vector<8x32xf32> to vector<8x32xbf16>
    %c0_6 = arith.constant 0 : index
    %c0_7 = arith.constant 0 : index
    %10 = vector.load %arg5[%c0_6, %c0_7] : memref<32x32xbf16, #tpu.memory_space<vmem>>, vector<32x32xbf16>
    %cst_8 = arith.constant dense<0.000000e+00> : vector<8x32xf32>
    %11 = tpu.matmul %9, %10, %cst_8 {dimension_numbers = #tpu.dot_dimension_numbers<[1], [0], [0], [1], [0, 0, 1, 1], [], []>} : vector<8x32xbf16>, vector<32x32xbf16>, vector<8x32xf32> -> vector<8x32xf32>
    %c0_9 = arith.constant 0 : index
    %c0_10 = arith.constant 0 : index
    %12 = vector.load %arg6[%c0_9, %c0_10] : memref<1x32xf32, #tpu.memory_space<vmem>>, vector<1x32xf32>
    %13 = vector.broadcast %12 : vector<1x32xf32> to vector<8x32xf32>
    %14 = arith.addf %11, %13 : vector<8x32xf32>
    %cst_11 = arith.constant 0.000000e+00 : f32
    %15 = vector.broadcast %cst_11 : f32 to vector<8x32xf32>
    %16 = arith.maximumf %14, %15 : vector<8x32xf32>
    %17 = arith.truncf %16 : vector<8x32xf32> to vector<8x32xbf16>
    %c0_12 = arith.constant 0 : index
    %c0_13 = arith.constant 0 : index
    %18 = vector.load %arg7[%c0_12, %c0_13] : memref<32x16xbf16, #tpu.memory_space<vmem>>, vector<32x16xbf16>
    %cst_14 = arith.constant dense<0.000000e+00> : vector<8x16xf32>
    %19 = tpu.matmul %17, %18, %cst_14 {dimension_numbers = #tpu.dot_dimension_numbers<[1], [0], [0], [1], [0, 0, 1, 1], [], []>} : vector<8x32xbf16>, vector<32x16xbf16>, vector<8x16xf32> -> vector<8x16xf32>
    %c0_15 = arith.constant 0 : index
    %c0_16 = arith.constant 0 : index
    %20 = vector.load %arg8[%c0_15, %c0_16] : memref<1x16xf32, #tpu.memory_space<vmem>>, vector<1x16xf32>
    %21 = vector.broadcast %20 : vector<1x16xf32> to vector<8x16xf32>
    %22 = arith.addf %19, %21 : vector<8x16xf32>
    %23 = vector.extract_strided_slice %22 {offsets = [0, 0], sizes = [8, 8], strides = [1, 1]} : vector<8x16xf32> to vector<8x8xf32>
    %24 = vector.extract_strided_slice %22 {offsets = [0, 8], sizes = [8, 8], strides = [1, 1]} : vector<8x16xf32> to vector<8x8xf32>
    %25 = math.tanh %24 : vector<8x8xf32>
    %cst_17 = arith.constant 1.000000e+00 : f32
    %26 = vector.broadcast %cst_17 : f32 to vector<8x8xf32>
    %27 = arith.addf %25, %26 : vector<8x8xf32>
    %cst_18 = arith.constant 3.500000e+00 : f32
    %28 = vector.broadcast %cst_18 : f32 to vector<8x8xf32>
    %29 = arith.mulf %28, %27 : vector<8x8xf32>
    %cst_19 = arith.constant -5.000000e+00 : f32
    %30 = vector.broadcast %cst_19 : f32 to vector<8x8xf32>
    %31 = arith.addf %30, %29 : vector<8x8xf32>
    %32 = math.exp %31 : vector<8x8xf32>
    %c0_20 = arith.constant 0 : index
    %c0_21 = arith.constant 0 : index
    %33 = vector.load %arg2[%c0_20, %c0_21] : memref<8x8xf32, #tpu.memory_space<vmem>>, vector<8x8xf32>
    %34 = arith.mulf %32, %33 : vector<8x8xf32>
    %35 = arith.addf %23, %34 : vector<8x8xf32>
    %36 = math.tanh %35 : vector<8x8xf32>
    %cst_22 = arith.constant 6.28318548 : f32
    %37 = math.log %cst_22 : f32
    %cst_23 = arith.constant 5.000000e-01 : f32
    %38 = arith.mulf %cst_23, %37 : f32
    %cst_24 = arith.constant -5.000000e-01 : f32
    %39 = vector.broadcast %cst_24 : f32 to vector<8x8xf32>
    %40 = arith.mulf %39, %33 : vector<8x8xf32>
    %41 = arith.mulf %40, %33 : vector<8x8xf32>
    %42 = vector.broadcast %38 : f32 to vector<8x8xf32>
    %43 = arith.subf %41, %42 : vector<8x8xf32>
    %cst_25 = arith.constant 2.000000e+00 : f32
    %44 = math.log %cst_25 : f32
    %45 = vector.broadcast %44 : f32 to vector<8x8xf32>
    %46 = arith.subf %45, %35 : vector<8x8xf32>
    %cst_26 = arith.constant -2.000000e+00 : f32
    %47 = vector.broadcast %cst_26 : f32 to vector<8x8xf32>
    %48 = arith.mulf %47, %35 : vector<8x8xf32>
    %cst_27 = arith.constant 0.000000e+00 : f32
    %49 = vector.broadcast %cst_27 : f32 to vector<8x8xf32>
    %50 = arith.maximumf %48, %49 : vector<8x8xf32>
    %51 = vector.broadcast %cst_27 : f32 to vector<8x8xf32>
    %52 = arith.subf %48, %51 : vector<8x8xf32>
    %53 = arith.cmpf one, %52, %52 : vector<8x8xf32>
    %54 = vector.broadcast %cst_27 : f32 to vector<8x8xf32>
    %55 = arith.addf %48, %54 : vector<8x8xf32>
    %56 = math.absf %52 : vector<8x8xf32>
    %cst_28 = arith.constant 0.000000e+00 : f32
    %57 = vector.broadcast %cst_28 : f32 to vector<8x8xf32>
    %58 = arith.subf %57, %56 : vector<8x8xf32>
    %59 = math.exp %58 : vector<8x8xf32>
    %60 = math.log1p %59 : vector<8x8xf32>
    %61 = arith.addf %50, %60 : vector<8x8xf32>
    %62 = arith.select %53, %55, %61 : vector<8x8xi1>, vector<8x8xf32>
    %63 = arith.subf %46, %62 : vector<8x8xf32>
    %cst_29 = arith.constant 2.000000e+00 : f32
    %64 = vector.broadcast %cst_29 : f32 to vector<8x8xf32>
    %65 = arith.mulf %64, %63 : vector<8x8xf32>
    %66 = arith.subf %43, %31 : vector<8x8xf32>
    %67 = arith.subf %66, %65 : vector<8x8xf32>
    %cst_30 = arith.constant dense<0.000000e+00> : vector<8xf32>
    %68 = vector.multi_reduction <add>, %67, %cst_30 [1] : vector<8x8xf32> to vector<8xf32>
    %69 = vector.shape_cast %68 : vector<8xf32> to vector<8x1xf32>
    %c0_31 = arith.constant 0 : index
    %c0_32 = arith.constant 0 : index
    %70 = vector.load %arg9[%c0_31, %c0_32] : memref<8x128xf32, #tpu.memory_space<vmem>>, vector<8x8xf32>
    tpu.vector_store %arg9[%c0_31, %c0_32], %36 {strides = array<i32>} : memref<8x128xf32, #tpu.memory_space<vmem>>, vector<8x8xf32>,
    %71 = math.tanh %23 : vector<8x8xf32>
    %c0_33 = arith.constant 0 : index
    %c8 = arith.constant 8 : index
    %72 = vector.load %arg9[%c0_33, %c8] : memref<8x128xf32, #tpu.memory_space<vmem>>, vector<8x8xf32>
    tpu.vector_store %arg9[%c0_33, %c8], %71 {strides = array<i32>} : memref<8x128xf32, #tpu.memory_space<vmem>>, vector<8x8xf32>,
    %c0_34 = arith.constant 0 : index
    %c16 = arith.constant 16 : index
    %73 = vector.load %arg9[%c0_34, %c16] : memref<8x128xf32, #tpu.memory_space<vmem>>, vector<8x8xf32>
    tpu.vector_store %arg9[%c0_34, %c16], %31 {strides = array<i32>} : memref<8x128xf32, #tpu.memory_space<vmem>>, vector<8x8xf32>,
    %c0_35 = arith.constant 0 : index
    %c24 = arith.constant 24 : index
    %74 = vector.load %arg9[%c0_35, %c24] : memref<8x128xf32, #tpu.memory_space<vmem>>, vector<8x1xf32>
    tpu.vector_store %arg9[%c0_35, %c24], %69 {strides = array<i32>} : memref<8x128xf32, #tpu.memory_space<vmem>>, vector<8x1xf32>,
    return
  }
  func.func @transform_0(%arg0: i32) -> (i32, i32) {
    %c0_i32 = arith.constant 0 : i32
    %c0_i32_0 = arith.constant 0 : i32
    return %arg0, %c0_i32 : i32, i32
  }
  func.func @transform_1(%arg0: i32) -> (i32, i32) {
    %c0_i32 = arith.constant 0 : i32
    %c0_i32_0 = arith.constant 0 : i32
    return %arg0, %c0_i32 : i32, i32
  }
  func.func @transform_2(%arg0: i32) -> (i32, i32) {
    %c0_i32 = arith.constant 0 : i32
    %c0_i32_0 = arith.constant 0 : i32
    %c0_i32_1 = arith.constant 0 : i32
    return %c0_i32, %c0_i32_0 : i32, i32
  }
  func.func @transform_3(%arg0: i32) -> (i32, i32) {
    %c0_i32 = arith.constant 0 : i32
    %c0_i32_0 = arith.constant 0 : i32
    %c0_i32_1 = arith.constant 0 : i32
    return %c0_i32, %c0_i32_0 : i32, i32
  }
  func.func @transform_4(%arg0: i32) -> (i32, i32) {
    %c0_i32 = arith.constant 0 : i32
    %c0_i32_0 = arith.constant 0 : i32
    %c0_i32_1 = arith.constant 0 : i32
    return %c0_i32, %c0_i32_0 : i32, i32
  }
  func.func @transform_5(%arg0: i32) -> (i32, i32) {
    %c0_i32 = arith.constant 0 : i32
    %c0_i32_0 = arith.constant 0 : i32
    %c0_i32_1 = arith.constant 0 : i32
    return %c0_i32, %c0_i32_0 : i32, i32
  }
  func.func @transform_6(%arg0: i32) -> (i32, i32) {
    %c0_i32 = arith.constant 0 : i32
    %c0_i32_0 = arith.constant 0 : i32
    %c0_i32_1 = arith.constant 0 : i32
    return %c0_i32, %c0_i32_0 : i32, i32
  }
  func.func @transform_7(%arg0: i32) -> (i32, i32) {
    %c0_i32 = arith.constant 0 : i32
    %c0_i32_0 = arith.constant 0 : i32
    %c0_i32_1 = arith.constant 0 : i32
    return %c0_i32, %c0_i32_0 : i32, i32
  }
  func.func @transform_8(%arg0: i32) -> (i32, i32) {
    %c0_i32 = arith.constant 0 : i32
    %c0_i32_0 = arith.constant 0 : i32
    return %arg0, %c0_i32 : i32, i32
  }
}

</mosaic_0001>

<llo_original>
// kernel: tpu_custom_call.1
$region0: #{tpu_custom_call.1}
  #allocation0 [shape = 'u32[]', space=smem, size = 0x4, offset = 0x4, fixed_abs, tag = 'smem constant byte address 0x4 - core index']
  #allocation1 [shape = 'u32[144,128]{1,0:T(1,128)}', space=vmem, size = 0x12000, scoped, tag = 'internal scratch']
  %s0 = inlined_call_operand.vmem [shape: f32[8,32], index: 0, kind: input, shape index: {}]
  %s1 = inlined_call_operand.hbm [shape: f32[8,8], index: 1, kind: input, shape index: {}]
  %s2 = inlined_call_operand.vmem [shape: bf16[32,32], index: 2, kind: input, shape index: {}]
  %s3 = inlined_call_operand.vmem [shape: f32[1,32], index: 3, kind: input, shape index: {}]
  %s4 = inlined_call_operand.hbm [shape: bf16[32,32], index: 4, kind: input, shape index: {}]
  %s5 = inlined_call_operand.vmem [shape: f32[1,32], index: 5, kind: input, shape index: {}]
  %s6 = inlined_call_operand.vmem [shape: bf16[32,16], index: 6, kind: input, shape index: {}]
  %s7 = inlined_call_operand.vmem [shape: f32[1,16], index: 7, kind: input, shape index: {}]
  %s8 = inlined_call_operand.hbm [shape: f32[8,128], index: 8, kind: output, shape index: {}]
  %s9 = sld [smem:[#allocation0]]
  $region50: #{tpu_custom_call.1} parent=0
    _
  %s11 = ssub.s32 1, %s9
  %s12 = scalar_select 0, %s11, %s9
  $region1: #{tpu_custom_call.1} parent=0
    #allocation2 [shape = 'u8[4096]{0}', space=vmem, size = 0x1000, scoped, tag = 'input window, operand 1, single buffered']
    #allocation3 [shape = 's32[1]{0}', space=sflag, size = 0x4, scoped, tag = 'scoped memory for tpu_custom_call.1']
    #allocation4 [shape = 's32[1]{0}', space=sflag, size = 0x4, scoped, tag = 'scoped memory for tpu_custom_call.1']
    #allocation5 [shape = 'u8[8192]{0}', space=vmem, size = 0x2000, scoped, tag = 'input window, operand 4, single buffered']
    #allocation6 [shape = 's32[1]{0}', space=sflag, size = 0x4, scoped, tag = 'scoped memory for tpu_custom_call.1']
    #allocation7 [shape = 'u8[4096]{0}', space=vmem, size = 0x1000, scoped, tag = 'output window, operand 0, single buffered']
    %13 = vsyncpa [#allocation3], 0
    %14 = vsyncpa [#allocation6], 0
    %15 = vsyncpa [#allocation4], 0
    // Predicated region
    $region2: #{tpu_custom_call.1} parent=1 // pred_check
      _
    $region3: #{tpu_custom_call.1} parent=1 // pred_check_branch
      %17 = sbr.rel (0) target = $region5
    $region4: #{tpu_custom_call.1} parent=1 // pred_region
      _
    $region5: #{tpu_custom_call.1} parent=1 // pred_fallthru
      _
    // Predicated region
    $region6: #{tpu_custom_call.1} parent=1 // pred_check
      _
    $region7: #{tpu_custom_call.1} parent=1 // pred_check_branch
      %19 = sbr.rel (0) target = $region9
    $region8: #{tpu_custom_call.1} parent=1 // pred_region
      %s21 = ssub.s32 128, 128
      %22 = vsyncadd [#allocation3], %s21
      %s24 = sshll.u32 [#allocation2], 4
      %s25 = int_to_ptr.vmem [resolvable:$true] %s24
      %27 = dma.hbm_to_vmem [thread:$0]  %s1, 128, %s25, [#allocation3]
    $region9: #{tpu_custom_call.1} parent=1 // pred_fallthru
      _
    // Predicated region
    $region10: #{tpu_custom_call.1} parent=1 // pred_check
      _
    $region11: #{tpu_custom_call.1} parent=1 // pred_check_branch
      %29 = sbr.rel (0) target = $region13
    $region12: #{tpu_custom_call.1} parent=1 // pred_region
      _
    $region13: #{tpu_custom_call.1} parent=1 // pred_fallthru
      _
    // Predicated region
    $region14: #{tpu_custom_call.1} parent=1 // pred_check
      _
    $region15: #{tpu_custom_call.1} parent=1 // pred_check_branch
      %31 = sbr.rel (0) target = $region17
    $region16: #{tpu_custom_call.1} parent=1 // pred_region
      _
    $region17: #{tpu_custom_call.1} parent=1 // pred_fallthru
      _
    // Predicated region
    $region18: #{tpu_custom_call.1} parent=1 // pred_check
      _
    $region19: #{tpu_custom_call.1} parent=1 // pred_check_branch
      %33 = sbr.rel (0) target = $region21
    $region20: #{tpu_custom_call.1} parent=1 // pred_region
      %s35 = ssub.s32 256, 256
      %36 = vsyncadd [#allocation6], %s35
      %s37 = sshll.u32 [#allocation5], 4
      %s38 = int_to_ptr.vmem [resolvable:$true] %s37
      %43 = dma.hbm_to_vmem [thread:$0]  %s4, 256, %s38, [#allocation6], 64, 64, 4
    $region21: #{tpu_custom_call.1} parent=1 // pred_fallthru
      _
    // Predicated region
    $region22: #{tpu_custom_call.1} parent=1 // pred_check
      _
    $region23: #{tpu_custom_call.1} parent=1 // pred_check_branch
      %45 = sbr.rel (0) target = $region25
    $region24: #{tpu_custom_call.1} parent=1 // pred_region
      _
    $region25: #{tpu_custom_call.1} parent=1 // pred_fallthru
      _
    // Predicated region
    $region26: #{tpu_custom_call.1} parent=1 // pred_check
      _
    $region27: #{tpu_custom_call.1} parent=1 // pred_check_branch
      %47 = sbr.rel (0) target = $region29
    $region28: #{tpu_custom_call.1} parent=1 // pred_region
      _
    $region29: #{tpu_custom_call.1} parent=1 // pred_fallthru
      _
    // Predicated region
    $region30: #{tpu_custom_call.1} parent=1 // pred_check
      _
    $region31: #{tpu_custom_call.1} parent=1 // pred_check_branch
      %49 = sbr.rel (0) target = $region33
    $region32: #{tpu_custom_call.1} parent=1 // pred_region
      _
    $region33: #{tpu_custom_call.1} parent=1 // pred_fallthru
      _
    // Predicated region
    $region34: #{tpu_custom_call.1} parent=1 // pred_check
      _
    $region35: #{tpu_custom_call.1} parent=1 // pred_check_branch
      %51 = sbr.rel (0) target = $region37
    $region36: #{tpu_custom_call.1} parent=1 // pred_region
      %52 = dma.done [#allocation3], 128
    $region37: #{tpu_custom_call.1} parent=1 // pred_fallthru
      _
    // Predicated region
    $region38: #{tpu_custom_call.1} parent=1 // pred_check
      _
    $region39: #{tpu_custom_call.1} parent=1 // pred_check_branch
      %54 = sbr.rel (0) target = $region41
    $region40: #{tpu_custom_call.1} parent=1 // pred_region
      %55 = dma.done [#allocation6], 256
    $region41: #{tpu_custom_call.1} parent=1 // pred_fallthru
      _
    %v57 = vld [vmem:[%s0] sm:$0xff]
    %v58 = vpack.c.bf16 %v57, %v57
    %v59 = vld [vmem:[%s2] sm:$0xf]
    %v60 = vld [vmem:[%s2 + $0x4] sm:$0xf]
    %v61 = vld [vmem:[%s2 + $0x8] sm:$0xf]
    %v62 = vld [vmem:[%s2 + $0xc] sm:$0xf]
    %v63 = vld [vmem:[%s3] sm:$0x1]
    %v65 = vlaneseq
    %v66 = vshrl.u32 %v65, 7
    %v67 = vsub.s32 0, %v66
    %v68 = vrot.slane %v63, %v67
    %v74 = vunpack.c.l.b16 %v59
    %v75 = vunpack.c.l.b16 %v60
    %v76 = vunpack.c.l.b16 %v61
    %v77 = vunpack.c.l.b16 %v62
    %v78 = vpack.c.b16 %v75, %v74
    %v79 = vpack.c.b16 %v77, %v76
    %vm82 = vcmask 261120
    %v84 = vsel %vm82, %v58, 0
    %86 = vmatprep.subr.bf16.mxu0 0
    %87 = vmatpush1.bf16.msra.mxu0 0
    %88 = vmatprep.subr.bf16.mxu0 0
    %89 = vmatpush1.bf16.msra.mxu0 0
    %90 = vmatprep.subr.bf16.mxu0 0
    %91 = vmatpush1.bf16.msra.mxu0 0
    %92 = vmatprep.subr.bf16.mxu0 0
    %93 = vmatpush1.bf16.msra.mxu0 0
    %94 = vmatprep.subr.bf16.mxu0 0
    %95 = vmatpush1.bf16.msra.mxu0 0
    %96 = vmatprep.subr.bf16.mxu0 0
    %97 = vmatpush1.bf16.msra.mxu0 0
    %98 = vmatprep.subr.bf16.mxu0 0
    %99 = vmatpush1.bf16.msra.mxu0 %v79
    %100 = vmatprep.subr.bf16.mxu0 0
    %101 = vmatpush1.bf16.msra.mxu0 %v78
    %102 = vmatprep.subr.bf16.mxu0 0
    %103 = vmatpush2.bf16.msra.mxu0 0
    %104 = vmatprep.subr.bf16.mxu0 0
    %105 = vmatpush2.bf16.msra.mxu0 0
    %106 = vmatprep.subr.bf16.mxu0 0
    %107 = vmatpush2.bf16.msra.mxu0 0
    %108 = vmatprep.subr.bf16.mxu0 0
    %109 = vmatpush2.bf16.msra.mxu0 0
    %110 = vmatprep.subr.bf16.mxu0 0
    %111 = vmatpush2.bf16.msra.mxu0 0
    %112 = vmatprep.subr.bf16.mxu0 0
    %113 = vmatpush2.bf16.msra.mxu0 0
    %114 = vmatprep.subr.bf16.mxu0 0
    %115 = vmatpush2.bf16.msra.mxu0 0
    %116 = vmatprep.subr.bf16.mxu0 0
    %117 = vmatpush2.bf16.msra.mxu0 0
    %118 = vmatprep.mubr.bf16.mxu0 0
    %119 = vmatmul.mubr.bf16.gmra.mxu0 %v84
    %v120 = vpop.f32.mrf.mxu0
    %v121 = vadd.f32 %v68, %v120
    %v122 = vpop.f32.mrf.mxu0
    %v123 = vpop.f32.mrf.mxu0
    %v124 = vpop.f32.mrf.mxu0
    %125 = vdwg.mxu0
    %v126 = vmax.f32 %v121, 0.0
    %v127 = vpack.c.bf16 %v126, %v126
    %v128 = vld [vmem:[#allocation5] sm:$0xf]
    %v129 = vld [vmem:[#allocation5 + $0x4] sm:$0xf]
    %v130 = vld [vmem:[#allocation5 + $0x8] sm:$0xf]
    %v131 = vld [vmem:[#allocation5 + $0xc] sm:$0xf]
    %v132 = vld [vmem:[%s5] sm:$0x1]
    %v134 = vlaneseq
    %v135 = vshrl.u32 %v134, 7
    %v136 = vsub.s32 0, %v135
    %v137 = vrot.slane %v132, %v136
    %v143 = vunpack.c.l.b16 %v128
    %v144 = vunpack.c.l.b16 %v129
    %v145 = vunpack.c.l.b16 %v130
    %v146 = vunpack.c.l.b16 %v131
    %v147 = vpack.c.b16 %v144, %v143
    %v148 = vpack.c.b16 %v146, %v145
    %v152 = vsel %vm82, %v127, 0
    %154 = vmatprep.subr.bf16.mxu0 0
    %155 = vmatpush1.bf16.msra.mxu0 0
    %156 = vmatprep.subr.bf16.mxu0 0
    %157 = vmatpush1.bf16.msra.mxu0 0
    %158 = vmatprep.subr.bf16.mxu0 0
    %159 = vmatpush1.bf16.msra.mxu0 0
    %160 = vmatprep.subr.bf16.mxu0 0
    %161 = vmatpush1.bf16.msra.mxu0 0
    %162 = vmatprep.subr.bf16.mxu0 0
    %163 = vmatpush1.bf16.msra.mxu0 0
    %164 = vmatprep.subr.bf16.mxu0 0
    %165 = vmatpush1.bf16.msra.mxu0 0
    %166 = vmatprep.subr.bf16.mxu0 0
    %167 = vmatpush1.bf16.msra.mxu0 %v148
    %168 = vmatprep.subr.bf16.mxu0 0
    %169 = vmatpush1.bf16.msra.mxu0 %v147
    %170 = vmatprep.subr.bf16.mxu0 0
    %171 = vmatpush2.bf16.msra.mxu0 0
    %172 = vmatprep.subr.bf16.mxu0 0
    %173 = vmatpush2.bf16.msra.mxu0 0
    %174 = vmatprep.subr.bf16.mxu0 0
    %175 = vmatpush2.bf16.msra.mxu0 0
    %176 = vmatprep.subr.bf16.mxu0 0
    %177 = vmatpush2.bf16.msra.mxu0 0
    %178 = vmatprep.subr.bf16.mxu0 0
    %179 = vmatpush2.bf16.msra.mxu0 0
    %180 = vmatprep.subr.bf16.mxu0 0
    %181 = vmatpush2.bf16.msra.mxu0 0
    %182 = vmatprep.subr.bf16.mxu0 0
    %183 = vmatpush2.bf16.msra.mxu0 0
    %184 = vmatprep.subr.bf16.mxu0 0
    %185 = vmatpush2.bf16.msra.mxu0 0
    %186 = vmatprep.mubr.bf16.mxu0 0
    %187 = vmatmul.mubr.bf16.gmra.mxu0 %v152
    %v188 = vpop.f32.mrf.mxu0
    %v189 = vadd.f32 %v137, %v188
    %v190 = vpop.f32.mrf.mxu0
    %v191 = vpop.f32.mrf.mxu0
    %v192 = vpop.f32.mrf.mxu0
    %193 = vdwg.mxu0
    %v194 = vmax.f32 %v189, 0.0
    %v195 = vpack.c.bf16 %v194, %v194
    %v196 = vld [vmem:[%s6] sm:$0xf]
    %v197 = vld [vmem:[%s6 + $0x4] sm:$0xf]
    %v198 = vld [vmem:[%s6 + $0x8] sm:$0xf]
    %v199 = vld [vmem:[%s6 + $0xc] sm:$0xf]
    %v200 = vld [vmem:[%s7] sm:$0x1]
    %v202 = vlaneseq
    %v203 = vshrl.u32 %v202, 7
    %v204 = vsub.s32 0, %v203
    %v205 = vrot.slane %v200, %v204
    %v211 = vunpack.c.l.b16 %v196
    %v212 = vunpack.c.l.b16 %v197
    %v213 = vunpack.c.l.b16 %v198
    %v214 = vunpack.c.l.b16 %v199
    %v215 = vpack.c.b16 %v212, %v211
    %v216 = vpack.c.b16 %v214, %v213
    %v220 = vsel %vm82, %v195, 0
    %222 = vmatprep.subr.bf16.mxu0 0
    %223 = vmatpush1.bf16.msra.mxu0 0
    %224 = vmatprep.subr.bf16.mxu0 0
    %225 = vmatpush1.bf16.msra.mxu0 0
    %226 = vmatprep.subr.bf16.mxu0 0
    %227 = vmatpush1.bf16.msra.mxu0 0
    %228 = vmatprep.subr.bf16.mxu0 0
    %229 = vmatpush1.bf16.msra.mxu0 0
    %230 = vmatprep.subr.bf16.mxu0 0
    %231 = vmatpush1.bf16.msra.mxu0 0
    %232 = vmatprep.subr.bf16.mxu0 0
    %233 = vmatpush1.bf16.msra.mxu0 0
    %234 = vmatprep.subr.bf16.mxu0 0
    %235 = vmatpush1.bf16.msra.mxu0 %v216
    %236 = vmatprep.subr.bf16.mxu0 0
    %237 = vmatpush1.bf16.msra.mxu0 %v215
    %238 = vmatprep.subr.bf16.mxu0 0
    %239 = vmatpush2.bf16.msra.mxu0 0
    %240 = vmatprep.subr.bf16.mxu0 0
    %241 = vmatpush2.bf16.msra.mxu0 0
    %242 = vmatprep.subr.bf16.mxu0 0
    %243 = vmatpush2.bf16.msra.mxu0 0
    %244 = vmatprep.subr.bf16.mxu0 0
    %245 = vmatpush2.bf16.msra.mxu0 0
    %246 = vmatprep.subr.bf16.mxu0 0
    %247 = vmatpush2.bf16.msra.mxu0 0
    %248 = vmatprep.subr.bf16.mxu0 0
    %249 = vmatpush2.bf16.msra.mxu0 0
    %250 = vmatprep.subr.bf16.mxu0 0
    %251 = vmatpush2.bf16.msra.mxu0 0
    %252 = vmatprep.subr.bf16.mxu0 0
    %253 = vmatpush2.bf16.msra.mxu0 0
    %254 = vmatprep.mubr.bf16.mxu0 0
    %255 = vmatmul.mubr.bf16.gmra.mxu0 %v220
    %v256 = vpop.f32.mrf.mxu0
    %v257 = vadd.f32 %v205, %v256
    %v258 = vpop.f32.mrf.mxu0
    %v259 = vpop.f32.mrf.mxu0
    %v260 = vpop.f32.mrf.mxu0
    %261 = vdwg.mxu0
    %v262 = vtanh.pop %v257
    %v263 = vadd.f32 %v262, 1.0
    %v264 = vmul.f32 %v263, 3.5
    %v265 = vadd.f32 %v264, -5.0
    %v266 = vmul.f32 %v265, 1.442695
    %v267 = vpow.pop %v266
    %v268 = vld [vmem:[#allocation2] sm:$0xff]
    %270 = vrot.lane.b32.xlu0 %v268, 8
    %v271 = vpop.permute.xlu0 %270
    %v273 = vmul.f32 %v267, %v271
    %275 = vrot.lane.b32.xlu0 %v273, 120
    %v276 = vpop.permute.xlu0 %275
    %v278 = vadd.f32 %v257, %v276
    %v279 = vtanh.pop %v278
    %v280 = vmul.f32 %v268, -0.5
    %v281 = vmul.f32 %v280, %v268
    %v282 = vsub.f32 %v281, 0.9189385
    %v283 = vsub.f32 0.6931472, %v278
    %v284 = vmul.f32 %v278, -2.0
    %v285 = vmax.f32 %v284, 0.0
    %vm286 = vcmp.ne.f32.partialorder %v284, %v284
    %v287 = vadd.f32 %v284, 0.0
    %v288 = vand.u32 2147483647, %v284
    %v289 = vsub.f32 0.0, %v288
    %v290 = vmul.f32 %v289, 1.442695
    %v291 = vpow.pop %v290
    %v292 = vadd.f32 %v291, 1.0
    %v293 = vlog2.pop %v292
    %v294 = vmul.f32 %v293, 0.6931472
    %v295 = vmul.f32 -0.5, %v291
    %v296 = vadd.f32 %v295, 1.0
    %v297 = vmul.f32 %v296, %v291
    %v298 = vand.u32 2147483647, %v291
    %vm299 = vcmp.lt.f32.partialorder %v298, 0.0004427343
    %v300 = vsel %vm299, %v297, %v294
    %v301 = vadd.f32 %v285, %v300
    %v302 = vsel %vm286, %v287, %v301
    %v303 = vsub.f32 %v283, %v302
    %v304 = vmul.f32 %v303, 2.0
    %306 = vrot.lane.b32.xlu0 %v265, 120
    %v307 = vpop.permute.xlu0 %306
    %v309 = vsub.f32 %v282, %v307
    %v310 = vsub.f32 %v309, %v304
    %vm311 = vcmask 64512
    %v312 = vsel %vm311, %v310, 0.0
    %313 = vadd.xlane.f32.xlu0 %v312
    %v314 = vpop.xlane.xlu0 %313
    %315 = vst.msk [vmem:[#allocation7] sm:$0xff] %vm311, %v279
    %317 = vrot.lane.b32.xlu0 %v262, 8
    %v318 = vpop.permute.xlu0 %317
    %vm320 = vcmask 130112
    %321 = vst.msk [vmem:[#allocation7] sm:$0xff] %vm320, %v318
    %322 = vrot.lane.b32.xlu0 %v265, 8
    %v323 = vpop.permute.xlu0 %322
    %vm325 = vcmask 195712
    %326 = vst.msk [vmem:[#allocation7] sm:$0xff] %vm325, %v323
    %vm327 = vcmask 203968
    %328 = vst.msk [vmem:[#allocation7] sm:$0xff] %vm327, %v314
    // Predicated region
    $region42: #{tpu_custom_call.1} parent=1 // pred_check
      _
    $region43: #{tpu_custom_call.1} parent=1 // pred_check_branch
      %330 = sbr.rel (0) target = $region45
    $region44: #{tpu_custom_call.1} parent=1 // pred_region
      %s332 = ssub.s32 128, 128
      %333 = vsyncadd [#allocation4], %s332
      %s335 = sshll.u32 [#allocation7], 4
      %s336 = int_to_ptr.vmem [resolvable:$true] %s335
      %338 = dma.vmem_to_hbm [thread:$0]  %s336, 128, %s8, [#allocation4]
    $region45: #{tpu_custom_call.1} parent=1 // pred_fallthru
      _
    // Predicated region
    $region46: #{tpu_custom_call.1} parent=1 // pred_check
      _
    $region47: #{tpu_custom_call.1} parent=1 // pred_check_branch
      %340 = sbr.rel (0) target = $region49
    $region48: #{tpu_custom_call.1} parent=1 // pred_region
      %341 = dma.done [#allocation4], 128
    $region49: #{tpu_custom_call.1} parent=1 // pred_fallthru
      _
    %342 = vsyncpa [#allocation3], 1
    %343 = vsyncpa [#allocation6], 1
    %344 = vsyncpa [#allocation4], 1

</llo_original>
